<compile_context>
chip_gen: v7x
topology: tpu7x:2x2x1
jax: 0.10.0
libtpu: 0.0.40
codegen_flags: <defaults>
</compile_context>

<pallas_src>
import math

import jax
import jax.numpy as jnp
from jax.experimental import pallas as pl
from jax.experimental.pallas import tpu as pltpu

# Class weights from the PyTorch module's __init__ (deterministic).
AU_WEIGHTS = [
    5.278187667237907, 12.42675934708439, 3.9182460964352357,
    2.3713836486482838, 1.5735074526534674, 1.8198100142634426,
    2.586578383618721, 22.66022149366239, 20.121237822349574,
    22.104986149584487, 1.0, 8.264810560409762,
]
NUM_CLASSES = len(AU_WEIGHTS)                   # 12
FOLD = 128 // math.gcd(NUM_CLASSES, 128)        # 32 rows folded per lane-dense row
WIDTH = NUM_CLASSES * FOLD                      # 384 lanes (3 full vregs wide)
NEG_PAD = -1.0e9                                # pad logit: exactly zero loss term


def _au_loss_kernel(pred_ref, label_ref, w_ref, sig_ref, part_ref):
    x = pred_ref[...]                           # (rows, 384) f32 logits
    y = label_ref[...]                          # (rows, 384) f32 targets in {0,1}
    w = w_ref[...]                              # (1, 384) tiled per-class weights

    # Single EUP exp reused for both the loss and the sigmoid.
    e = jnp.exp(-jnp.abs(x))

    # Numerically stable BCE-with-logits: max(x,0) - x*y + log(1 + exp(-|x|))
    elem = jnp.maximum(x, 0.0) - x * y + jnp.log1p(e)
    weighted = elem * w                         # broadcast (1,384) over rows

    # Per-block per-lane partial sum (cheap sublane reduce). The cross-lane
    # collapse + mean is done once in the wrapper.
    part_ref[...] = jnp.sum(weighted, axis=0, keepdims=True).reshape(1, 1, WIDTH)

    # Exact sigmoid from the same exp: x>=0 -> 1/(1+e), x<0 -> e/(1+e).
    inv = 1.0 / (1.0 + e)
    sig_ref[...] = jnp.where(x >= 0.0, inv, e * inv).astype(sig_ref.dtype)


def compute_au_loss_bce(pred, label, *, block_rows=1024):
    """pred, label: (bz, seq, 12) arrays. Returns (loss, AU_pred, label2d)."""
    bz, seq, c = pred.shape
    assert c == NUM_CLASSES
    n = bz * seq

    pred2d = pred.reshape(n, c).astype(jnp.float32)
    label2d = label.reshape(n, c).astype(jnp.float32)

    # Lane-dense folding: 32 original rows of 12 classes -> 1 row of 384 lanes.
    nf = (n + FOLD - 1) // FOLD                 # folded rows before grid padding
    block_rows = min(block_rows, nf)            # shrink block for small inputs
    num_blocks = (nf + block_rows - 1) // block_rows
    nf_pad = num_blocks * block_rows
    n_total = nf_pad * FOLD
    pad = n_total - n
    if pad:
        pred_p = jnp.pad(pred2d, ((0, pad), (0, 0)), constant_values=NEG_PAD)
        label_p = jnp.pad(label2d, ((0, pad), (0, 0)), constant_values=0.0)
    else:
        pred_p, label_p = pred2d, label2d
    pred_f = pred_p.reshape(nf_pad, WIDTH)
    label_f = label_p.reshape(nf_pad, WIDTH)

    # Weights tiled to match the folded layout (repeats every 12 lanes).
    w_tiled = jnp.tile(jnp.asarray(AU_WEIGHTS, dtype=jnp.float32), FOLD).reshape(1, WIDTH)

    sig_f, partials = pl.pallas_call(
        _au_loss_kernel,
        out_shape=(
            jax.ShapeDtypeStruct((nf_pad, WIDTH), jnp.float32),        # sigmoid (folded)
            jax.ShapeDtypeStruct((num_blocks, 1, WIDTH), jnp.float32),  # per-block partials
        ),
        grid=(num_blocks,),
        in_specs=[
            pl.BlockSpec((block_rows, WIDTH), lambda i: (i, 0)),
            pl.BlockSpec((block_rows, WIDTH), lambda i: (i, 0)),
            pl.BlockSpec((1, WIDTH), lambda i: (0, 0)),                 # weights stay resident
        ],
        out_specs=(
            pl.BlockSpec((block_rows, WIDTH), lambda i: (i, 0)),
            pl.BlockSpec((1, 1, WIDTH), lambda i: (i, 0, 0)),
        ),
        compiler_params=pltpu.CompilerParams(
            dimension_semantics=("parallel",),   # no resident accumulator -> shardable (v7x)
        ),
    )(pred_f, label_f, w_tiled)

    # Final tiny reduction + mean (padded rows contribute exactly 0).
    cls_loss = jnp.sum(partials) / jnp.float32(n * c)
    au_pred = sig_f.reshape(n_total, c)[:n]
    return cls_loss, au_pred, label2d


def _reference(pred, label):
    bz, seq, c = pred.shape
    x = pred.reshape(bz * seq, c).astype(jnp.float32)
    y = label.reshape(bz * seq, c).astype(jnp.float32)
    w = jnp.asarray(AU_WEIGHTS, dtype=jnp.float32)[None, :]
    elem = jnp.maximum(x, 0.0) - x * y + jnp.log1p(jnp.exp(-jnp.abs(x)))
    loss = jnp.mean(elem * w)
    return loss, jax.nn.sigmoid(x), y


if __name__ == "__main__":
    key = jax.random.PRNGKey(0)
    k1, k2 = jax.random.split(key)

    # Small shapes consistent with the module's forward: (bz, seq, 12).
    bz, seq = 2, 8
    pred = jax.random.normal(k1, (bz, seq, NUM_CLASSES), dtype=jnp.float32)
    label = (jax.random.uniform(k2, (bz, seq, NUM_CLASSES)) > 0.5).astype(jnp.float32)

    loss, au_pred, label2d = compute_au_loss_bce(pred, label)
    jax.block_until_ready((loss, au_pred, label2d))

    ref_loss, ref_sig, ref_lab = _reference(pred, label)
    assert jnp.allclose(loss, ref_loss, atol=1e-5, rtol=1e-5)
    assert jnp.allclose(au_pred, ref_sig, atol=1e-5, rtol=1e-5)
    assert jnp.allclose(label2d, ref_lab)

    # Second (still small) case exercising the row grid + padding path.
    k3, k4 = jax.random.split(k2)
    bz2, seq2 = 4, 300                          # N = 1200 -> padded, multi-block grid
    pred2 = jax.random.normal(k3, (bz2, seq2, NUM_CLASSES), dtype=jnp.float32)
    label2 = (jax.random.uniform(k4, (bz2, seq2, NUM_CLASSES)) > 0.5).astype(jnp.float32)
    loss2, sig2, lab2 = compute_au_loss_bce(pred2, label2, block_rows=8)
    jax.block_until_ready((loss2, sig2, lab2))
    rl2, rs2, rlab2 = _reference(pred2, label2)
    assert jnp.allclose(loss2, rl2, atol=1e-5, rtol=1e-5)
    assert jnp.allclose(sig2, rs2, atol=1e-5, rtol=1e-5)
    assert jnp.allclose(lab2, rlab2)

    print("KERNEL_OK")
</pallas_src>

<mosaic_0001>
module attributes {stable_mosaic.version = 11 : i64} {
  func.func @_au_loss_kernel(%arg0: i32, %arg1: memref<1x384xf32, #tpu.memory_space<vmem>>, %arg2: memref<1x384xf32, #tpu.memory_space<vmem>>, %arg3: memref<1x384xf32, #tpu.memory_space<vmem>>, %arg4: memref<1x384xf32, #tpu.memory_space<vmem>>, %arg5: memref<1x1x384xf32, #tpu.memory_space<vmem>>) attributes {dimension_semantics = [#tpu.dimension_semantics<parallel>], iteration_bounds = array<i64: 1>, scalar_prefetch = 0 : i64, scratch_operands = 0 : i64, tpu.core_type = #tpu.core_type<tc>, window_params = [{transform_indices = @transform_0, window_bounds = array<i64: 1, 384>}, {transform_indices = @transform_1, window_bounds = array<i64: 1, 384>}, {pipeline_mode = #tpu.pipeline_mode<synchronous>, transform_indices = @transform_2, window_bounds = array<i64: 1, 384>}, {transform_indices = @transform_3, window_bounds = array<i64: 1, 384>}, {transform_indices = @transform_4, window_bounds = array<i64: 1, 1, 384>}]} {
    %c0 = arith.constant 0 : index
    %c0_0 = arith.constant 0 : index
    %0 = vector.load %arg1[%c0, %c0_0] : memref<1x384xf32, #tpu.memory_space<vmem>>, vector<1x384xf32>
    %c0_1 = arith.constant 0 : index
    %c0_2 = arith.constant 0 : index
    %1 = vector.load %arg2[%c0_1, %c0_2] : memref<1x384xf32, #tpu.memory_space<vmem>>, vector<1x384xf32>
    %c0_3 = arith.constant 0 : index
    %c0_4 = arith.constant 0 : index
    %2 = vector.load %arg3[%c0_3, %c0_4] : memref<1x384xf32, #tpu.memory_space<vmem>>, vector<1x384xf32>
    %3 = math.absf %0 : vector<1x384xf32>
    %cst = arith.constant 0.000000e+00 : f32
    %4 = vector.broadcast %cst : f32 to vector<1x384xf32>
    %5 = arith.subf %4, %3 : vector<1x384xf32>
    %6 = math.exp %5 : vector<1x384xf32>
    %cst_5 = arith.constant 0.000000e+00 : f32
    %7 = vector.broadcast %cst_5 : f32 to vector<1x384xf32>
    %8 = arith.maximumf %0, %7 : vector<1x384xf32>
    %9 = arith.mulf %0, %1 : vector<1x384xf32>
    %10 = arith.subf %8, %9 : vector<1x384xf32>
    %11 = math.log1p %6 : vector<1x384xf32>
    %12 = arith.addf %10, %11 : vector<1x384xf32>
    %13 = arith.mulf %12, %2 : vector<1x384xf32>
    %cst_6 = arith.constant dense<0.000000e+00> : vector<384xf32>
    %14 = vector.multi_reduction <add>, %13, %cst_6 [0] : vector<1x384xf32> to vector<384xf32>
    %15 = vector.shape_cast %14 : vector<384xf32> to vector<1x384xf32>
    %16 = vector.shape_cast %15 : vector<1x384xf32> to vector<1x1x384xf32>
    %c0_7 = arith.constant 0 : index
    %c0_8 = arith.constant 0 : index
    %c0_9 = arith.constant 0 : index
    %17 = vector.load %arg5[%c0_7, %c0_8, %c0_9] : memref<1x1x384xf32, #tpu.memory_space<vmem>>, vector<1x1x384xf32>
    tpu.vector_store %arg5[%c0_7, %c0_8, %c0_9], %16 {strides = array<i32>} : memref<1x1x384xf32, #tpu.memory_space<vmem>>, vector<1x1x384xf32>,
    %cst_10 = arith.constant 1.000000e+00 : f32
    %18 = vector.broadcast %cst_10 : f32 to vector<1x384xf32>
    %19 = arith.addf %18, %6 : vector<1x384xf32>
    %cst_11 = arith.constant 1.000000e+00 : f32
    %20 = vector.broadcast %cst_11 : f32 to vector<1x384xf32>
    %21 = arith.divf %20, %19 : vector<1x384xf32>
    %cst_12 = arith.constant 0.000000e+00 : f32
    %22 = vector.broadcast %cst_12 : f32 to vector<1x384xf32>
    %23 = arith.cmpf oge, %0, %22 : vector<1x384xf32>
    %24 = arith.mulf %6, %21 : vector<1x384xf32>
    %25 = arith.select %23, %21, %24 : vector<1x384xi1>, vector<1x384xf32>
    %c0_13 = arith.constant 0 : index
    %c0_14 = arith.constant 0 : index
    %26 = vector.load %arg4[%c0_13, %c0_14] : memref<1x384xf32, #tpu.memory_space<vmem>>, vector<1x384xf32>
    tpu.vector_store %arg4[%c0_13, %c0_14], %25 {strides = array<i32>} : memref<1x384xf32, #tpu.memory_space<vmem>>, vector<1x384xf32>,
    return
  }
  func.func @transform_0(%arg0: i32) -> (i32, i32) {
    %c0_i32 = arith.constant 0 : i32
    %c0_i32_0 = arith.constant 0 : i32
    return %arg0, %c0_i32 : i32, i32
  }
  func.func @transform_1(%arg0: i32) -> (i32, i32) {
    %c0_i32 = arith.constant 0 : i32
    %c0_i32_0 = arith.constant 0 : i32
    return %arg0, %c0_i32 : i32, i32
  }
  func.func @transform_2(%arg0: i32) -> (i32, i32) {
    %c0_i32 = arith.constant 0 : i32
    %c0_i32_0 = arith.constant 0 : i32
    %c0_i32_1 = arith.constant 0 : i32
    return %c0_i32, %c0_i32_0 : i32, i32
  }
  func.func @transform_3(%arg0: i32) -> (i32, i32) {
    %c0_i32 = arith.constant 0 : i32
    %c0_i32_0 = arith.constant 0 : i32
    return %arg0, %c0_i32 : i32, i32
  }
  func.func @transform_4(%arg0: i32) -> (i32, i32, i32) {
    %c0_i32 = arith.constant 0 : i32
    %c0_i32_0 = arith.constant 0 : i32
    %c0_i32_1 = arith.constant 0 : i32
    return %arg0, %c0_i32, %c0_i32_0 : i32, i32, i32
  }
}

</mosaic_0001>

<llo_original>
// kernel: tpu_custom_call.1
$region0: #{tpu_custom_call.1}
  #allocation0 [shape = 'u32[]', space=smem, size = 0x4, offset = 0x4, fixed_abs, tag = 'smem constant byte address 0x4 - core index']
  #allocation1 [shape = 'u32[144,128]{1,0:T(1,128)}', space=vmem, size = 0x12000, scoped, tag = 'internal scratch']
  %s0 = inlined_call_operand.hbm [shape: f32[1,384], index: 0, kind: input, shape index: {}]
  %s1 = inlined_call_operand.vmem [shape: f32[1,384], index: 1, kind: input, shape index: {}]
  %s2 = inlined_call_operand.vmem [shape: f32[1,384], index: 2, kind: input, shape index: {}]
  %s3 = inlined_call_operand.hbm [shape: f32[1,384], index: 3, kind: output, shape index: {0}]
  %s4 = inlined_call_operand.hbm [shape: f32[1,1,384], index: 4, kind: output, shape index: {1}]
  %5 = xla_tuple %s3, %s4
  %s6 = sld [smem:[#allocation0]]
  $region34: #{tpu_custom_call.1} parent=0
    _
  %s8 = ssub.s32 1, %s6
  %s9 = scalar_select 0, %s8, %s6
  $region1: #{tpu_custom_call.1} parent=0
    #allocation2 [shape = 'u8[1536]{0}', space=vmem, size = 0x800, scoped, tag = 'input window, operand 0, single buffered']
    #allocation3 [shape = 's32[1]{0}', space=sflag, size = 0x4, scoped, tag = 'scoped memory for tpu_custom_call.1']
    #allocation4 [shape = 's32[1]{0}', space=sflag, size = 0x4, scoped, tag = 'scoped memory for tpu_custom_call.1']
    #allocation5 [shape = 'u8[1536]{0}', space=vmem, size = 0x800, scoped, tag = 'output window, operand 0, single buffered']
    #allocation6 [shape = 'u8[1536]{0}', space=vmem, size = 0x800, scoped, tag = 'output window, operand 1, single buffered']
    #allocation7 [shape = 's32[1]{0}', space=sflag, size = 0x4, scoped, tag = 'scoped memory for tpu_custom_call.1']
    %10 = vsyncpa [#allocation3], 0
    %11 = vsyncpa [#allocation4], 0
    %12 = vsyncpa [#allocation7], 0
    // Predicated region
    $region2: #{tpu_custom_call.1} parent=1 // pred_check
      _
    $region3: #{tpu_custom_call.1} parent=1 // pred_check_branch
      %14 = sbr.rel (0) target = $region5
    $region4: #{tpu_custom_call.1} parent=1 // pred_region
      %s16 = ssub.s32 48, 48
      %17 = vsyncadd [#allocation3], %s16
      %s19 = sshll.u32 [#allocation2], 4
      %s20 = int_to_ptr.vmem [resolvable:$true] %s19
      %22 = dma.hbm_to_vmem [thread:$0]  %s0, 48, %s20, [#allocation3]
    $region5: #{tpu_custom_call.1} parent=1 // pred_fallthru
      _
    // Predicated region
    $region6: #{tpu_custom_call.1} parent=1 // pred_check
      _
    $region7: #{tpu_custom_call.1} parent=1 // pred_check_branch
      %24 = sbr.rel (0) target = $region9
    $region8: #{tpu_custom_call.1} parent=1 // pred_region
      _
    $region9: #{tpu_custom_call.1} parent=1 // pred_fallthru
      _
    // Predicated region
    $region10: #{tpu_custom_call.1} parent=1 // pred_check
      _
    $region11: #{tpu_custom_call.1} parent=1 // pred_check_branch
      %26 = sbr.rel (0) target = $region13
    $region12: #{tpu_custom_call.1} parent=1 // pred_region
      _
    $region13: #{tpu_custom_call.1} parent=1 // pred_fallthru
      _
    // Predicated region
    $region14: #{tpu_custom_call.1} parent=1 // pred_check
      _
    $region15: #{tpu_custom_call.1} parent=1 // pred_check_branch
      %28 = sbr.rel (0) target = $region17
    $region16: #{tpu_custom_call.1} parent=1 // pred_region
      %29 = dma.done [#allocation3], 48
    $region17: #{tpu_custom_call.1} parent=1 // pred_fallthru
      _
    %v30 = vld [vmem:[#allocation2] sm:$0x7]
    %v31 = vld [vmem:[%s1] sm:$0x7]
    %v32 = vld [vmem:[%s2] sm:$0x7]
    %v33 = vand.u32 2147483647, %v30
    %v34 = vsub.f32 0.0, %v33
    %v35 = vmul.f32 %v34, 1.442695
    %v36 = vpow.pop %v35
    %v37 = vmax.f32 %v30, 0.0
    %v38 = vmul.f32 %v30, %v31
    %v39 = vsub.f32 %v37, %v38
    %v40 = vadd.f32 %v36, 1.0
    %v41 = vlog2.pop %v40
    %v42 = vmul.f32 %v41, 0.6931472
    %v43 = vmul.f32 -0.5, %v36
    %v44 = vadd.f32 %v43, 1.0
    %v45 = vmul.f32 %v44, %v36
    %v46 = vand.u32 2147483647, %v36
    %vm47 = vcmp.lt.f32.partialorder %v46, 0.0004427343
    %v48 = vsel %vm47, %v45, %v42
    %v49 = vadd.f32 %v39, %v48
    %v50 = vmul.f32 %v49, %v32
    %v51 = vadd.f32 %v50, 0.0
    %v52 = vlaneseq
    %vm53 = vcmp.ge.s32.totalorder %v52, 0
    %vm54 = vcmp.lt.s32.totalorder %v52, 384
    %vm55 = vmand %vm53, %vm54
    %56 = vst.msk [vmem:[#allocation6] sm:$0x7] %vm55, %v51
    %v57 = vadd.f32 %v36, 1.0
    %v58 = vrcp.pop %v57
    %v59 = vmul.f32 1.0, %v58
    %vm60 = vcmp.ge.f32.partialorder %v30, 0.0
    %v61 = vmul.f32 %v36, %v59
    %v62 = vsel %vm60, %v59, %v61
    %63 = vst.msk [vmem:[#allocation5] sm:$0x7] %vm55, %v62
    // Predicated region
    $region18: #{tpu_custom_call.1} parent=1 // pred_check
      _
    $region19: #{tpu_custom_call.1} parent=1 // pred_check_branch
      %65 = sbr.rel (0) target = $region21
    $region20: #{tpu_custom_call.1} parent=1 // pred_region
      %s67 = ssub.s32 48, 48
      %68 = vsyncadd [#allocation4], %s67
      %s70 = sshll.u32 [#allocation5], 4
      %s71 = int_to_ptr.vmem [resolvable:$true] %s70
      %73 = dma.vmem_to_hbm [thread:$0]  %s71, 48, %s3, [#allocation4]
    $region21: #{tpu_custom_call.1} parent=1 // pred_fallthru
      _
    // Predicated region
    $region22: #{tpu_custom_call.1} parent=1 // pred_check
      _
    $region23: #{tpu_custom_call.1} parent=1 // pred_check_branch
      %75 = sbr.rel (0) target = $region25
    $region24: #{tpu_custom_call.1} parent=1 // pred_region
      %s77 = ssub.s32 48, 48
      %78 = vsyncadd [#allocation7], %s77
      %s80 = sshll.u32 [#allocation6], 4
      %s81 = int_to_ptr.vmem [resolvable:$true] %s80
      %83 = dma.vmem_to_hbm [thread:$0]  %s81, 48, %s4, [#allocation7]
    $region25: #{tpu_custom_call.1} parent=1 // pred_fallthru
      _
    // Predicated region
    $region26: #{tpu_custom_call.1} parent=1 // pred_check
      _
    $region27: #{tpu_custom_call.1} parent=1 // pred_check_branch
      %85 = sbr.rel (0) target = $region29
    $region28: #{tpu_custom_call.1} parent=1 // pred_region
      %86 = dma.done [#allocation4], 48
    $region29: #{tpu_custom_call.1} parent=1 // pred_fallthru
      _
    // Predicated region
    $region30: #{tpu_custom_call.1} parent=1 // pred_check
      _
    $region31: #{tpu_custom_call.1} parent=1 // pred_check_branch
      %88 = sbr.rel (0) target = $region33
    $region32: #{tpu_custom_call.1} parent=1 // pred_region
      %89 = dma.done [#allocation7], 48
    $region33: #{tpu_custom_call.1} parent=1 // pred_fallthru
      _
    %90 = vsyncpa [#allocation3], 1
    %91 = vsyncpa [#allocation4], 1
    %92 = vsyncpa [#allocation7], 1

</llo_original>
